<compile_context>
chip_gen: v6e
topology: v6e:2x2x1
jax: 0.10.0
libtpu: 0.0.40
codegen_flags: <defaults>
</compile_context>

<pallas_src>
import jax
import jax.numpy as jnp
from jax import lax
from jax.experimental import pallas as pl
from jax.experimental.pallas import tpu as pltpu

EPS_BN = 1e-5


def _vmem_specs(n):
    return [pl.BlockSpec(memory_space=pltpu.MemorySpace.VMEM) for _ in range(n)]


# ---------------- Single fused kernel -------------------------------------------
def gnn_fused_kernel(x_ref, w1_ref, b1_ref, hmat_ref, theta_ref, cbias_ref,
                     wl0_ref, bl0_ref, wl1_ref, bl1_ref, mask_ref, o_ref):
    # ---- layer 0: (BN-folded) Linear + ReLU ------------------------------------
    h = jnp.dot(x_ref[...], w1_ref[...], preferred_element_type=jnp.float32) + b1_ref[...]
    h = jnp.maximum(h, 0.0)                                               # (N, L)

    # ---- layer 1: HypergraphConv (use_attention=False, hyperedge_weight=1) -----
    H = hmat_ref[...]                                                     # (N, M)
    xp = jnp.dot(h, theta_ref[...], preferred_element_type=jnp.float32)   # (N, L)
    # e = H^T @ xp without materializing H^T: contract node axis (0) of both.
    e = lax.dot_general(H, xp, dimension_numbers=(((0,), (0,)), ((), ())),
                        preferred_element_type=jnp.float32)               # (M, L)
    bdeg = jnp.sum(H, axis=0)[:, None]                                    # (M, 1) hyperedge degree
    binv = jnp.where(bdeg > 0, 1.0 / bdeg, 0.0)
    e = e * binv
    ddeg = jnp.sum(H, axis=1, keepdims=True)                              # (N, 1) node degree
    dinv = jnp.where(ddeg > 0, 1.0 / ddeg, 0.0)
    x1 = jnp.dot(H, e, preferred_element_type=jnp.float32) * dinv + cbias_ref[...]  # (N, L)

    # ---- readout: out = Linear0(h) + Linear1(x1) (dropout identity in eval) ----
    z0 = jnp.dot(h, wl0_ref[...], preferred_element_type=jnp.float32) + bl0_ref[...]
    z1 = jnp.dot(x1, wl1_ref[...], preferred_element_type=jnp.float32) + bl1_ref[...]
    out = z0 + z1                                                         # (N, T)

    # ---- pooling_clusters (agg='max') over (batch, cluster) groups -------------
    # Per-group 2-D masked max in the existing (N, T) layout; no (G, N, T) broadcast.
    # TODO(synk): torch reference emits torch.zeros(128) for an empty group (only
    # shape-consistent when dim_target == 128); here empty groups produce zeros(dim_target).
    mask = mask_ref[...]                                                  # (G, N)
    G = mask.shape[0]
    neg = jnp.float32(-1e30)
    rows = []
    for g in range(G):  # G is small & static -> fully unrolled
        mrow = mask[g, :][:, None]                                        # (N, 1)
        rows.append(jnp.max(jnp.where(mrow > 0, out, neg), axis=0, keepdims=True))  # (1, T)
    pooled = jnp.concatenate(rows, axis=0)                                # (G, T)
    count = jnp.sum(mask, axis=1, keepdims=True)                          # (G, 1)
    o_ref[...] = jnp.where(count > 0, pooled, 0.0)


def gnn_clusters_forward(x, H, group_onehot, params, num_batches, num_clusters):
    r = lambda v: v.reshape(1, -1)  # 1-D params -> (1, L) rows

    # Fold BatchNorm (eval) into the first Linear: one-time constant fold.
    scale = params["bn_gamma"] * lax.rsqrt(params["bn_var"] + EPS_BN)     # (L,)
    w1_folded = params["w1"] * scale[None, :]                             # (F, L)
    b1_folded = (params["b1"] - params["bn_mean"]) * scale + params["bn_beta"]

    g = group_onehot.shape[0]
    t = params["wl0"].shape[1]
    pooled = pl.pallas_call(
        gnn_fused_kernel,
        out_shape=jax.ShapeDtypeStruct((g, t), jnp.float32),
        in_specs=_vmem_specs(11),
        out_specs=pl.BlockSpec(memory_space=pltpu.MemorySpace.VMEM),
    )(x, w1_folded, r(b1_folded), H, params["theta"], r(params["conv_bias"]),
      params["wl0"], r(params["bl0"]), params["wl1"], r(params["bl1"]), group_onehot)
    return pooled.reshape(num_batches, num_clusters, -1)


# ---------------- Pure-JAX reference (for correctness check) --------------------
def reference_forward(x, H, group_onehot, params, num_batches, num_clusters):
    h = x @ params["w1"] + params["b1"]
    h = (h - params["bn_mean"]) / jnp.sqrt(params["bn_var"] + EPS_BN) * params["bn_gamma"] + params["bn_beta"]
    h = jnp.maximum(h, 0.0)
    z0 = h @ params["wl0"] + params["bl0"]
    xp = h @ params["theta"]
    bdeg = H.sum(0)
    binv = jnp.where(bdeg > 0, 1.0 / bdeg, 0.0)
    ddeg = H.sum(1)
    dinv = jnp.where(ddeg > 0, 1.0 / ddeg, 0.0)
    e = (H.T @ xp) * binv[:, None]
    x1 = (H @ e) * dinv[:, None] + params["conv_bias"]
    z1 = x1 @ params["wl1"] + params["bl1"]
    out = z0 + z1
    masked = jnp.where(group_onehot[:, :, None] > 0, out[None, :, :], -1e30)
    pooled = masked.max(axis=1)
    cnt = group_onehot.sum(axis=1)
    pooled = jnp.where(cnt[:, None] > 0, pooled, 0.0)
    return pooled.reshape(num_batches, num_clusters, -1)


if __name__ == "__main__":
    key = jax.random.PRNGKey(0)
    N, dim_features, dim_target = 32, 16, 8     # nodes, node features, targets
    L = 32                                      # layers = [32, 32]
    num_batches, num_clusters, M = 2, 4, 6      # graphs, clusters, hyperedges

    keys = jax.random.split(key, 12)
    x = jax.random.normal(keys[0], (N, dim_features), jnp.float32)
    batch = jnp.repeat(jnp.arange(num_batches), N // num_batches)
    clusters = jnp.arange(N) % num_clusters

    # hyperedge_index: each node belongs to two distinct hyperedges
    nodes = jnp.arange(N)
    e0 = nodes % M
    e1 = (3 * nodes + 1) % M
    edge_index = jnp.stack([jnp.concatenate([nodes, nodes]),
                            jnp.concatenate([e0, e1])])
    H = jnp.zeros((N, M), jnp.float32).at[edge_index[0], edge_index[1]].set(1.0)

    params = dict(
        w1=0.2 * jax.random.normal(keys[1], (dim_features, L), jnp.float32),
        b1=0.1 * jax.random.normal(keys[2], (L,), jnp.float32),
        bn_gamma=1.0 + 0.1 * jax.random.normal(keys[3], (L,), jnp.float32),
        bn_beta=0.1 * jax.random.normal(keys[4], (L,), jnp.float32),
        bn_mean=0.1 * jax.random.normal(keys[5], (L,), jnp.float32),
        bn_var=1.0 + 0.5 * jax.random.uniform(keys[6], (L,), jnp.float32),
        wl0=0.2 * jax.random.normal(keys[7], (L, dim_target), jnp.float32),
        bl0=0.1 * jax.random.normal(keys[8], (dim_target,), jnp.float32),
        theta=0.2 * jax.random.normal(keys[9], (L, L), jnp.float32),
        conv_bias=0.1 * jax.random.normal(keys[10], (L,), jnp.float32),
        wl1=0.2 * jax.random.normal(keys[11], (L, dim_target), jnp.float32),
        bl1=jnp.zeros((dim_target,), jnp.float32),
    )

    # one-hot (batch, cluster) group membership, group g = b * num_clusters + c
    gids = jnp.arange(num_batches * num_clusters)
    group_onehot = ((batch[None, :] == (gids[:, None] // num_clusters)) &
                    (clusters[None, :] == (gids[:, None] % num_clusters))).astype(jnp.float32)

    out = gnn_clusters_forward(x, H, group_onehot, params, num_batches, num_clusters)
    out = jax.block_until_ready(out)
    assert out.shape == (num_batches, num_clusters, dim_target)

    ref = reference_forward(x, H, group_onehot, params, num_batches, num_clusters)
    if not jnp.allclose(out, ref, atol=5e-2, rtol=5e-3):
        raise AssertionError("Pallas result does not match JAX reference")

    print("KERNEL_OK")
</pallas_src>

<mosaic_0001>
module attributes {stable_mosaic.version = 11 : i64} {
  func.func @gnn_fused_kernel(%arg0: memref<32x16xf32, #tpu.memory_space<vmem>>, %arg1: memref<16x32xf32, #tpu.memory_space<vmem>>, %arg2: memref<1x32xf32, #tpu.memory_space<vmem>>, %arg3: memref<32x6xf32, #tpu.memory_space<vmem>>, %arg4: memref<32x32xf32, #tpu.memory_space<vmem>>, %arg5: memref<1x32xf32, #tpu.memory_space<vmem>>, %arg6: memref<32x8xf32, #tpu.memory_space<vmem>>, %arg7: memref<1x8xf32, #tpu.memory_space<vmem>>, %arg8: memref<32x8xf32, #tpu.memory_space<vmem>>, %arg9: memref<1x8xf32, #tpu.memory_space<vmem>>, %arg10: memref<8x32xf32, #tpu.memory_space<vmem>>, %arg11: memref<8x8xf32, #tpu.memory_space<vmem>>) attributes {dimension_semantics = [], scalar_prefetch = 0 : i64, scratch_operands = 0 : i64, tpu.core_type = #tpu.core_type<tc>} {
    %c0 = arith.constant 0 : index
    %c0_0 = arith.constant 0 : index
    %0 = vector.load %arg0[%c0, %c0_0] : memref<32x16xf32, #tpu.memory_space<vmem>>, vector<32x16xf32>
    %c0_1 = arith.constant 0 : index
    %c0_2 = arith.constant 0 : index
    %1 = vector.load %arg1[%c0_1, %c0_2] : memref<16x32xf32, #tpu.memory_space<vmem>>, vector<16x32xf32>
    %cst = arith.constant dense<0.000000e+00> : vector<32x32xf32>
    %2 = tpu.matmul %0, %1, %cst {dimension_numbers = #tpu.dot_dimension_numbers<[1], [0], [0], [1], [0, 0, 1, 1], [], []>} : vector<32x16xf32>, vector<16x32xf32>, vector<32x32xf32> -> vector<32x32xf32>
    %c0_3 = arith.constant 0 : index
    %c0_4 = arith.constant 0 : index
    %3 = vector.load %arg2[%c0_3, %c0_4] : memref<1x32xf32, #tpu.memory_space<vmem>>, vector<1x32xf32>
    %4 = vector.broadcast %3 : vector<1x32xf32> to vector<32x32xf32>
    %5 = arith.addf %2, %4 : vector<32x32xf32>
    %cst_5 = arith.constant 0.000000e+00 : f32
    %6 = vector.broadcast %cst_5 : f32 to vector<32x32xf32>
    %7 = arith.maximumf %5, %6 : vector<32x32xf32>
    %c0_6 = arith.constant 0 : index
    %c0_7 = arith.constant 0 : index
    %8 = vector.load %arg3[%c0_6, %c0_7] : memref<32x6xf32, #tpu.memory_space<vmem>>, vector<32x6xf32>
    %c0_8 = arith.constant 0 : index
    %c0_9 = arith.constant 0 : index
    %9 = vector.load %arg4[%c0_8, %c0_9] : memref<32x32xf32, #tpu.memory_space<vmem>>, vector<32x32xf32>
    %cst_10 = arith.constant dense<0.000000e+00> : vector<32x32xf32>
    %10 = tpu.matmul %7, %9, %cst_10 {dimension_numbers = #tpu.dot_dimension_numbers<[1], [0], [0], [1], [0, 0, 1, 1], [], []>} : vector<32x32xf32>, vector<32x32xf32>, vector<32x32xf32> -> vector<32x32xf32>
    %cst_11 = arith.constant dense<0.000000e+00> : vector<6x32xf32>
    %11 = tpu.matmul %8, %10, %cst_11 {dimension_numbers = #tpu.dot_dimension_numbers<[0], [0], [1], [1], [0, 1, 1, 1], [], []>} : vector<32x6xf32>, vector<32x32xf32>, vector<6x32xf32> -> vector<6x32xf32>
    %cst_12 = arith.constant dense<0.000000e+00> : vector<6xf32>
    %12 = vector.multi_reduction <add>, %8, %cst_12 [0] : vector<32x6xf32> to vector<6xf32>
    %13 = vector.shape_cast %12 : vector<6xf32> to vector<6x1xf32>
    %cst_13 = arith.constant 0.000000e+00 : f32
    %14 = vector.broadcast %cst_13 : f32 to vector<6x1xf32>
    %15 = arith.cmpf ogt, %13, %14 : vector<6x1xf32>
    %cst_14 = arith.constant 1.000000e+00 : f32
    %16 = vector.broadcast %cst_14 : f32 to vector<6x1xf32>
    %17 = arith.divf %16, %13 : vector<6x1xf32>
    %cst_15 = arith.constant 0.000000e+00 : f32
    %18 = vector.broadcast %cst_15 : f32 to vector<6x1xf32>
    %19 = arith.select %15, %17, %18 : vector<6x1xi1>, vector<6x1xf32>
    %20 = vector.broadcast %19 : vector<6x1xf32> to vector<6x32xf32>
    %21 = arith.mulf %11, %20 : vector<6x32xf32>
    %cst_16 = arith.constant dense<0.000000e+00> : vector<32xf32>
    %22 = vector.multi_reduction <add>, %8, %cst_16 [1] : vector<32x6xf32> to vector<32xf32>
    %23 = vector.shape_cast %22 : vector<32xf32> to vector<32x1xf32>
    %cst_17 = arith.constant 0.000000e+00 : f32
    %24 = vector.broadcast %cst_17 : f32 to vector<32x1xf32>
    %25 = arith.cmpf ogt, %23, %24 : vector<32x1xf32>
    %cst_18 = arith.constant 1.000000e+00 : f32
    %26 = vector.broadcast %cst_18 : f32 to vector<32x1xf32>
    %27 = arith.divf %26, %23 : vector<32x1xf32>
    %cst_19 = arith.constant 0.000000e+00 : f32
    %28 = vector.broadcast %cst_19 : f32 to vector<32x1xf32>
    %29 = arith.select %25, %27, %28 : vector<32x1xi1>, vector<32x1xf32>
    %cst_20 = arith.constant dense<0.000000e+00> : vector<32x32xf32>
    %30 = tpu.matmul %8, %21, %cst_20 {dimension_numbers = #tpu.dot_dimension_numbers<[1], [0], [0], [1], [0, 0, 1, 1], [], []>} : vector<32x6xf32>, vector<6x32xf32>, vector<32x32xf32> -> vector<32x32xf32>
    %31 = vector.broadcast %29 : vector<32x1xf32> to vector<32x32xf32>
    %32 = arith.mulf %30, %31 : vector<32x32xf32>
    %c0_21 = arith.constant 0 : index
    %c0_22 = arith.constant 0 : index
    %33 = vector.load %arg5[%c0_21, %c0_22] : memref<1x32xf32, #tpu.memory_space<vmem>>, vector<1x32xf32>
    %34 = vector.broadcast %33 : vector<1x32xf32> to vector<32x32xf32>
    %35 = arith.addf %32, %34 : vector<32x32xf32>
    %c0_23 = arith.constant 0 : index
    %c0_24 = arith.constant 0 : index
    %36 = vector.load %arg6[%c0_23, %c0_24] : memref<32x8xf32, #tpu.memory_space<vmem>>, vector<32x8xf32>
    %cst_25 = arith.constant dense<0.000000e+00> : vector<32x8xf32>
    %37 = tpu.matmul %7, %36, %cst_25 {dimension_numbers = #tpu.dot_dimension_numbers<[1], [0], [0], [1], [0, 0, 1, 1], [], []>} : vector<32x32xf32>, vector<32x8xf32>, vector<32x8xf32> -> vector<32x8xf32>
    %c0_26 = arith.constant 0 : index
    %c0_27 = arith.constant 0 : index
    %38 = vector.load %arg7[%c0_26, %c0_27] : memref<1x8xf32, #tpu.memory_space<vmem>>, vector<1x8xf32>
    %39 = vector.broadcast %38 : vector<1x8xf32> to vector<32x8xf32>
    %40 = arith.addf %37, %39 : vector<32x8xf32>
    %c0_28 = arith.constant 0 : index
    %c0_29 = arith.constant 0 : index
    %41 = vector.load %arg8[%c0_28, %c0_29] : memref<32x8xf32, #tpu.memory_space<vmem>>, vector<32x8xf32>
    %cst_30 = arith.constant dense<0.000000e+00> : vector<32x8xf32>
    %42 = tpu.matmul %35, %41, %cst_30 {dimension_numbers = #tpu.dot_dimension_numbers<[1], [0], [0], [1], [0, 0, 1, 1], [], []>} : vector<32x32xf32>, vector<32x8xf32>, vector<32x8xf32> -> vector<32x8xf32>
    %c0_31 = arith.constant 0 : index
    %c0_32 = arith.constant 0 : index
    %43 = vector.load %arg9[%c0_31, %c0_32] : memref<1x8xf32, #tpu.memory_space<vmem>>, vector<1x8xf32>
    %44 = vector.broadcast %43 : vector<1x8xf32> to vector<32x8xf32>
    %45 = arith.addf %42, %44 : vector<32x8xf32>
    %46 = arith.addf %40, %45 : vector<32x8xf32>
    %c0_33 = arith.constant 0 : index
    %c0_34 = arith.constant 0 : index
    %47 = vector.load %arg10[%c0_33, %c0_34] : memref<8x32xf32, #tpu.memory_space<vmem>>, vector<8x32xf32>
    %48 = vector.extract_strided_slice %47 {offsets = [0, 0], sizes = [1, 32], strides = [1, 1]} : vector<8x32xf32> to vector<1x32xf32>
    %49 = vector.shape_cast %48 : vector<1x32xf32> to vector<32xf32>
    %50 = vector.shape_cast %49 : vector<32xf32> to vector<32x1xf32>
    %cst_35 = arith.constant 0.000000e+00 : f32
    %51 = vector.broadcast %cst_35 : f32 to vector<32x1xf32>
    %52 = arith.cmpf ogt, %50, %51 : vector<32x1xf32>
    %cst_36 = arith.constant -1.000000e+30 : f32
    %53 = vector.shape_cast %52 : vector<32x1xi1> to vector<32x1xi1>
    %54 = vector.broadcast %53 : vector<32x1xi1> to vector<32x8xi1>
    %55 = vector.broadcast %cst_36 : f32 to vector<32x8xf32>
    %56 = arith.select %54, %46, %55 : vector<32x8xi1>, vector<32x8xf32>
    %cst_37 = arith.constant dense<0xFF800000> : vector<8xf32>
    %57 = vector.multi_reduction <maximumf>, %56, %cst_37 [0] : vector<32x8xf32> to vector<8xf32>
    %58 = vector.shape_cast %57 : vector<8xf32> to vector<1x8xf32>
    %59 = vector.extract_strided_slice %47 {offsets = [1, 0], sizes = [1, 32], strides = [1, 1]} : vector<8x32xf32> to vector<1x32xf32>
    %60 = vector.shape_cast %59 : vector<1x32xf32> to vector<32xf32>
    %61 = vector.shape_cast %60 : vector<32xf32> to vector<32x1xf32>
    %cst_38 = arith.constant 0.000000e+00 : f32
    %62 = vector.broadcast %cst_38 : f32 to vector<32x1xf32>
    %63 = arith.cmpf ogt, %61, %62 : vector<32x1xf32>
    %cst_39 = arith.constant -1.000000e+30 : f32
    %64 = vector.shape_cast %63 : vector<32x1xi1> to vector<32x1xi1>
    %65 = vector.broadcast %64 : vector<32x1xi1> to vector<32x8xi1>
    %66 = vector.broadcast %cst_39 : f32 to vector<32x8xf32>
    %67 = arith.select %65, %46, %66 : vector<32x8xi1>, vector<32x8xf32>
    %cst_40 = arith.constant dense<0xFF800000> : vector<8xf32>
    %68 = vector.multi_reduction <maximumf>, %67, %cst_40 [0] : vector<32x8xf32> to vector<8xf32>
    %69 = vector.shape_cast %68 : vector<8xf32> to vector<1x8xf32>
    %70 = vector.extract_strided_slice %47 {offsets = [2, 0], sizes = [1, 32], strides = [1, 1]} : vector<8x32xf32> to vector<1x32xf32>
    %71 = vector.shape_cast %70 : vector<1x32xf32> to vector<32xf32>
    %72 = vector.shape_cast %71 : vector<32xf32> to vector<32x1xf32>
    %cst_41 = arith.constant 0.000000e+00 : f32
    %73 = vector.broadcast %cst_41 : f32 to vector<32x1xf32>
    %74 = arith.cmpf ogt, %72, %73 : vector<32x1xf32>
    %cst_42 = arith.constant -1.000000e+30 : f32
    %75 = vector.shape_cast %74 : vector<32x1xi1> to vector<32x1xi1>
    %76 = vector.broadcast %75 : vector<32x1xi1> to vector<32x8xi1>
    %77 = vector.broadcast %cst_42 : f32 to vector<32x8xf32>
    %78 = arith.select %76, %46, %77 : vector<32x8xi1>, vector<32x8xf32>
    %cst_43 = arith.constant dense<0xFF800000> : vector<8xf32>
    %79 = vector.multi_reduction <maximumf>, %78, %cst_43 [0] : vector<32x8xf32> to vector<8xf32>
    %80 = vector.shape_cast %79 : vector<8xf32> to vector<1x8xf32>
    %81 = vector.extract_strided_slice %47 {offsets = [3, 0], sizes = [1, 32], strides = [1, 1]} : vector<8x32xf32> to vector<1x32xf32>
    %82 = vector.shape_cast %81 : vector<1x32xf32> to vector<32xf32>
    %83 = vector.shape_cast %82 : vector<32xf32> to vector<32x1xf32>
    %cst_44 = arith.constant 0.000000e+00 : f32
    %84 = vector.broadcast %cst_44 : f32 to vector<32x1xf32>
    %85 = arith.cmpf ogt, %83, %84 : vector<32x1xf32>
    %cst_45 = arith.constant -1.000000e+30 : f32
    %86 = vector.shape_cast %85 : vector<32x1xi1> to vector<32x1xi1>
    %87 = vector.broadcast %86 : vector<32x1xi1> to vector<32x8xi1>
    %88 = vector.broadcast %cst_45 : f32 to vector<32x8xf32>
    %89 = arith.select %87, %46, %88 : vector<32x8xi1>, vector<32x8xf32>
    %cst_46 = arith.constant dense<0xFF800000> : vector<8xf32>
    %90 = vector.multi_reduction <maximumf>, %89, %cst_46 [0] : vector<32x8xf32> to vector<8xf32>
    %91 = vector.shape_cast %90 : vector<8xf32> to vector<1x8xf32>
    %92 = vector.extract_strided_slice %47 {offsets = [4, 0], sizes = [1, 32], strides = [1, 1]} : vector<8x32xf32> to vector<1x32xf32>
    %93 = vector.shape_cast %92 : vector<1x32xf32> to vector<32xf32>
    %94 = vector.shape_cast %93 : vector<32xf32> to vector<32x1xf32>
    %cst_47 = arith.constant 0.000000e+00 : f32
    %95 = vector.broadcast %cst_47 : f32 to vector<32x1xf32>
    %96 = arith.cmpf ogt, %94, %95 : vector<32x1xf32>
    %cst_48 = arith.constant -1.000000e+30 : f32
    %97 = vector.shape_cast %96 : vector<32x1xi1> to vector<32x1xi1>
    %98 = vector.broadcast %97 : vector<32x1xi1> to vector<32x8xi1>
    %99 = vector.broadcast %cst_48 : f32 to vector<32x8xf32>
    %100 = arith.select %98, %46, %99 : vector<32x8xi1>, vector<32x8xf32>
    %cst_49 = arith.constant dense<0xFF800000> : vector<8xf32>
    %101 = vector.multi_reduction <maximumf>, %100, %cst_49 [0] : vector<32x8xf32> to vector<8xf32>
    %102 = vector.shape_cast %101 : vector<8xf32> to vector<1x8xf32>
    %103 = vector.extract_strided_slice %47 {offsets = [5, 0], sizes = [1, 32], strides = [1, 1]} : vector<8x32xf32> to vector<1x32xf32>
    %104 = vector.shape_cast %103 : vector<1x32xf32> to vector<32xf32>
    %105 = vector.shape_cast %104 : vector<32xf32> to vector<32x1xf32>
    %cst_50 = arith.constant 0.000000e+00 : f32
    %106 = vector.broadcast %cst_50 : f32 to vector<32x1xf32>
    %107 = arith.cmpf ogt, %105, %106 : vector<32x1xf32>
    %cst_51 = arith.constant -1.000000e+30 : f32
    %108 = vector.shape_cast %107 : vector<32x1xi1> to vector<32x1xi1>
    %109 = vector.broadcast %108 : vector<32x1xi1> to vector<32x8xi1>
    %110 = vector.broadcast %cst_51 : f32 to vector<32x8xf32>
    %111 = arith.select %109, %46, %110 : vector<32x8xi1>, vector<32x8xf32>
    %cst_52 = arith.constant dense<0xFF800000> : vector<8xf32>
    %112 = vector.multi_reduction <maximumf>, %111, %cst_52 [0] : vector<32x8xf32> to vector<8xf32>
    %113 = vector.shape_cast %112 : vector<8xf32> to vector<1x8xf32>
    %114 = vector.extract_strided_slice %47 {offsets = [6, 0], sizes = [1, 32], strides = [1, 1]} : vector<8x32xf32> to vector<1x32xf32>
    %115 = vector.shape_cast %114 : vector<1x32xf32> to vector<32xf32>
    %116 = vector.shape_cast %115 : vector<32xf32> to vector<32x1xf32>
    %cst_53 = arith.constant 0.000000e+00 : f32
    %117 = vector.broadcast %cst_53 : f32 to vector<32x1xf32>
    %118 = arith.cmpf ogt, %116, %117 : vector<32x1xf32>
    %cst_54 = arith.constant -1.000000e+30 : f32
    %119 = vector.shape_cast %118 : vector<32x1xi1> to vector<32x1xi1>
    %120 = vector.broadcast %119 : vector<32x1xi1> to vector<32x8xi1>
    %121 = vector.broadcast %cst_54 : f32 to vector<32x8xf32>
    %122 = arith.select %120, %46, %121 : vector<32x8xi1>, vector<32x8xf32>
    %cst_55 = arith.constant dense<0xFF800000> : vector<8xf32>
    %123 = vector.multi_reduction <maximumf>, %122, %cst_55 [0] : vector<32x8xf32> to vector<8xf32>
    %124 = vector.shape_cast %123 : vector<8xf32> to vector<1x8xf32>
    %125 = vector.extract_strided_slice %47 {offsets = [7, 0], sizes = [1, 32], strides = [1, 1]} : vector<8x32xf32> to vector<1x32xf32>
    %126 = vector.shape_cast %125 : vector<1x32xf32> to vector<32xf32>
    %127 = vector.shape_cast %126 : vector<32xf32> to vector<32x1xf32>
    %cst_56 = arith.constant 0.000000e+00 : f32
    %128 = vector.broadcast %cst_56 : f32 to vector<32x1xf32>
    %129 = arith.cmpf ogt, %127, %128 : vector<32x1xf32>
    %cst_57 = arith.constant -1.000000e+30 : f32
    %130 = vector.shape_cast %129 : vector<32x1xi1> to vector<32x1xi1>
    %131 = vector.broadcast %130 : vector<32x1xi1> to vector<32x8xi1>
    %132 = vector.broadcast %cst_57 : f32 to vector<32x8xf32>
    %133 = arith.select %131, %46, %132 : vector<32x8xi1>, vector<32x8xf32>
    %cst_58 = arith.constant dense<0xFF800000> : vector<8xf32>
    %134 = vector.multi_reduction <maximumf>, %133, %cst_58 [0] : vector<32x8xf32> to vector<8xf32>
    %135 = vector.shape_cast %134 : vector<8xf32> to vector<1x8xf32>
    %136 = tpu.concatenate %58, %69, %80, %91, %102, %113, %124, %135 in 0 : vector<1x8xf32>, vector<1x8xf32>, vector<1x8xf32>, vector<1x8xf32>, vector<1x8xf32>, vector<1x8xf32>, vector<1x8xf32>, vector<1x8xf32> -> vector<8x8xf32>
    %cst_59 = arith.constant dense<0.000000e+00> : vector<8xf32>
    %137 = vector.multi_reduction <add>, %47, %cst_59 [1] : vector<8x32xf32> to vector<8xf32>
    %138 = vector.shape_cast %137 : vector<8xf32> to vector<8x1xf32>
    %cst_60 = arith.constant 0.000000e+00 : f32
    %139 = vector.broadcast %cst_60 : f32 to vector<8x1xf32>
    %140 = arith.cmpf ogt, %138, %139 : vector<8x1xf32>
    %cst_61 = arith.constant 0.000000e+00 : f32
    %141 = vector.shape_cast %140 : vector<8x1xi1> to vector<8x1xi1>
    %142 = vector.broadcast %141 : vector<8x1xi1> to vector<8x8xi1>
    %143 = vector.broadcast %cst_61 : f32 to vector<8x8xf32>
    %144 = arith.select %142, %136, %143 : vector<8x8xi1>, vector<8x8xf32>
    %c0_62 = arith.constant 0 : index
    %c0_63 = arith.constant 0 : index
    %145 = vector.load %arg11[%c0_62, %c0_63] : memref<8x8xf32, #tpu.memory_space<vmem>>, vector<8x8xf32>
    tpu.vector_store %arg11[%c0_62, %c0_63], %144 {strides = array<i32>} : memref<8x8xf32, #tpu.memory_space<vmem>>, vector<8x8xf32>,
    return
  }
}

</mosaic_0001>

<llo_original>
// kernel: tpu_custom_call.1
$region0: #{tpu_custom_call.1}
  #allocation0 [shape = 'u32[]', space=smem, size = 0x4, offset = 0x4, fixed_abs, tag = 'smem constant byte address 0x4 - core index']
  #allocation1 [shape = 'u32[144,128]{1,0:T(1,128)}', space=vmem, size = 0x12000, scoped, tag = 'internal scratch']
  %s0 = inlined_call_operand.vmem [shape: f32[32,16], index: 0, kind: input, shape index: {}]
  %s1 = inlined_call_operand.vmem [shape: f32[16,32], index: 1, kind: input, shape index: {}]
  %s2 = inlined_call_operand.vmem [shape: f32[1,32], index: 2, kind: input, shape index: {}]
  %s3 = inlined_call_operand.vmem [shape: f32[32,6], index: 3, kind: input, shape index: {}]
  %s4 = inlined_call_operand.vmem [shape: f32[32,32], index: 4, kind: input, shape index: {}]
  %s5 = inlined_call_operand.vmem [shape: f32[1,32], index: 5, kind: input, shape index: {}]
  %s6 = inlined_call_operand.vmem [shape: f32[32,8], index: 6, kind: input, shape index: {}]
  %s7 = inlined_call_operand.vmem [shape: f32[1,8], index: 7, kind: input, shape index: {}]
  %s8 = inlined_call_operand.vmem [shape: f32[32,8], index: 8, kind: input, shape index: {}]
  %s9 = inlined_call_operand.vmem [shape: f32[1,8], index: 9, kind: input, shape index: {}]
  %s10 = inlined_call_operand.vmem [shape: f32[8,32], index: 10, kind: input, shape index: {}]
  %s11 = inlined_call_operand.hbm [shape: f32[8,8], index: 11, kind: output, shape index: {}]
  %s12 = sld [smem:[#allocation0]]
  $region54: #{tpu_custom_call.1} parent=0
    _
  %s14 = ssub.s32 1, %s12
  %s15 = scalar_select 0, %s14, %s12
  $region1: #{tpu_custom_call.1} parent=0
    #allocation2 [shape = 'u8[4096]{0}', space=vmem, size = 0x1000, scoped, tag = 'output window, operand 0, single buffered']
    #allocation3 [shape = 's32[1]{0}', space=sflag, size = 0x4, scoped, tag = 'scoped memory for tpu_custom_call.1']
    %16 = vsyncpa [#allocation3], 0
    // Predicated region
    $region2: #{tpu_custom_call.1} parent=1 // pred_check
      _
    $region3: #{tpu_custom_call.1} parent=1 // pred_check_branch
      %18 = sbr.rel (0) target = $region5
    $region4: #{tpu_custom_call.1} parent=1 // pred_region
      _
    $region5: #{tpu_custom_call.1} parent=1 // pred_fallthru
      _
    // Predicated region
    $region6: #{tpu_custom_call.1} parent=1 // pred_check
      _
    $region7: #{tpu_custom_call.1} parent=1 // pred_check_branch
      %20 = sbr.rel (0) target = $region9
    $region8: #{tpu_custom_call.1} parent=1 // pred_region
      _
    $region9: #{tpu_custom_call.1} parent=1 // pred_fallthru
      _
    // Predicated region
    $region10: #{tpu_custom_call.1} parent=1 // pred_check
      _
    $region11: #{tpu_custom_call.1} parent=1 // pred_check_branch
      %22 = sbr.rel (0) target = $region13
    $region12: #{tpu_custom_call.1} parent=1 // pred_region
      _
    $region13: #{tpu_custom_call.1} parent=1 // pred_fallthru
      _
    // Predicated region
    $region14: #{tpu_custom_call.1} parent=1 // pred_check
      _
    $region15: #{tpu_custom_call.1} parent=1 // pred_check_branch
      %24 = sbr.rel (0) target = $region17
    $region16: #{tpu_custom_call.1} parent=1 // pred_region
      _
    $region17: #{tpu_custom_call.1} parent=1 // pred_fallthru
      _
    // Predicated region
    $region18: #{tpu_custom_call.1} parent=1 // pred_check
      _
    $region19: #{tpu_custom_call.1} parent=1 // pred_check_branch
      %26 = sbr.rel (0) target = $region21
    $region20: #{tpu_custom_call.1} parent=1 // pred_region
      _
    $region21: #{tpu_custom_call.1} parent=1 // pred_fallthru
      _
    // Predicated region
    $region22: #{tpu_custom_call.1} parent=1 // pred_check
      _
    $region23: #{tpu_custom_call.1} parent=1 // pred_check_branch
      %28 = sbr.rel (0) target = $region25
    $region24: #{tpu_custom_call.1} parent=1 // pred_region
      _
    $region25: #{tpu_custom_call.1} parent=1 // pred_fallthru
      _
    // Predicated region
    $region26: #{tpu_custom_call.1} parent=1 // pred_check
      _
    $region27: #{tpu_custom_call.1} parent=1 // pred_check_branch
      %30 = sbr.rel (0) target = $region29
    $region28: #{tpu_custom_call.1} parent=1 // pred_region
      _
    $region29: #{tpu_custom_call.1} parent=1 // pred_fallthru
      _
    // Predicated region
    $region30: #{tpu_custom_call.1} parent=1 // pred_check
      _
    $region31: #{tpu_custom_call.1} parent=1 // pred_check_branch
      %32 = sbr.rel (0) target = $region33
    $region32: #{tpu_custom_call.1} parent=1 // pred_region
      _
    $region33: #{tpu_custom_call.1} parent=1 // pred_fallthru
      _
    // Predicated region
    $region34: #{tpu_custom_call.1} parent=1 // pred_check
      _
    $region35: #{tpu_custom_call.1} parent=1 // pred_check_branch
      %34 = sbr.rel (0) target = $region37
    $region36: #{tpu_custom_call.1} parent=1 // pred_region
      _
    $region37: #{tpu_custom_call.1} parent=1 // pred_fallthru
      _
    // Predicated region
    $region38: #{tpu_custom_call.1} parent=1 // pred_check
      _
    $region39: #{tpu_custom_call.1} parent=1 // pred_check_branch
      %36 = sbr.rel (0) target = $region41
    $region40: #{tpu_custom_call.1} parent=1 // pred_region
      _
    $region41: #{tpu_custom_call.1} parent=1 // pred_fallthru
      _
    // Predicated region
    $region42: #{tpu_custom_call.1} parent=1 // pred_check
      _
    $region43: #{tpu_custom_call.1} parent=1 // pred_check_branch
      %38 = sbr.rel (0) target = $region45
    $region44: #{tpu_custom_call.1} parent=1 // pred_region
      _
    $region45: #{tpu_custom_call.1} parent=1 // pred_fallthru
      _
    %v39 = vld [vmem:[%s0] sm:$0xff]
    %v40 = vld [vmem:[%s0 + $0x8] sm:$0xff]
    %v41 = vld [vmem:[%s0 + $0x10] sm:$0xff]
    %v42 = vld [vmem:[%s0 + $0x18] sm:$0xff]
    %v43 = vld [vmem:[%s1] sm:$0xff]
    %v44 = vld [vmem:[%s1 + $0x8] sm:$0xff]
    %v45 = vld [vmem:[%s2] sm:$0x1]
    %v47 = vlaneseq
    %v48 = vshrl.u32 %v47, 7
    %v49 = vsub.s32 0, %v48
    %v50 = vrot.slane %v45, %v49
    %vm52 = vcmask 130048
    %v54 = vsel %vm52, %v39, 0
    %v57 = vsel %vm52, %v40, 0
    %v60 = vsel %vm52, %v41, 0
    %v63 = vsel %vm52, %v42, 0
    %65 = vmatprep.subr.mxu0 0.0
    %66 = vmatpush1.msra.mxu0 0.0
    %67 = vmatprep.subr.mxu0 0.0
    %68 = vmatpush1.msra.mxu0 0.0
    %69 = vmatprep.subr.mxu0 0.0
    %70 = vmatpush1.msra.mxu0 0.0
    %71 = vmatprep.subr.mxu0 0.0
    %72 = vmatpush1.msra.mxu0 0.0
    %73 = vmatprep.subr.mxu0 0.0
    %74 = vmatpush1.msra.mxu0 0.0
    %75 = vmatprep.subr.mxu0 0.0
    %76 = vmatpush1.msra.mxu0 0.0
    %77 = vmatprep.subr.mxu0 0.0
    %78 = vmatpush1.msra.mxu0 0.0
    %79 = vmatprep.subr.mxu0 0.0
    %80 = vmatpush1.msra.mxu0 0.0
    %81 = vmatprep.subr.mxu0 0.0
    %82 = vmatpush1.msra.mxu0 0.0
    %83 = vmatprep.subr.mxu0 0.0
    %84 = vmatpush1.msra.mxu0 0.0
    %85 = vmatprep.subr.mxu0 0.0
    %86 = vmatpush1.msra.mxu0 0.0
    %87 = vmatprep.subr.mxu0 0.0
    %88 = vmatpush1.msra.mxu0 0.0
    %89 = vmatprep.subr.mxu0 0.0
    %90 = vmatpush1.msra.mxu0 0.0
    %91 = vmatprep.subr.mxu0 0.0
    %92 = vmatpush1.msra.mxu0 0.0
    %93 = vmatprep.subr.mxu0 0.0
    %94 = vmatpush1.msra.mxu0 %v44
    %95 = vmatprep.subr.mxu0 0.0
    %96 = vmatpush1.msra.mxu0 %v43
    %97 = vmatprep.subr.mxu0 0.0
    %98 = vmatpush2.msra.mxu0 0.0
    %99 = vmatprep.subr.mxu0 0.0
    %100 = vmatpush2.msra.mxu0 0.0
    %101 = vmatprep.subr.mxu0 0.0
    %102 = vmatpush2.msra.mxu0 0.0
    %103 = vmatprep.subr.mxu0 0.0
    %104 = vmatpush2.msra.mxu0 0.0
    %105 = vmatprep.subr.mxu0 0.0
    %106 = vmatpush2.msra.mxu0 0.0
    %107 = vmatprep.subr.mxu0 0.0
    %108 = vmatpush2.msra.mxu0 0.0
    %109 = vmatprep.subr.mxu0 0.0
    %110 = vmatpush2.msra.mxu0 0.0
    %111 = vmatprep.subr.mxu0 0.0
    %112 = vmatpush2.msra.mxu0 0.0
    %113 = vmatprep.subr.mxu0 0.0
    %114 = vmatpush2.msra.mxu0 0.0
    %115 = vmatprep.subr.mxu0 0.0
    %116 = vmatpush2.msra.mxu0 0.0
    %117 = vmatprep.subr.mxu0 0.0
    %118 = vmatpush2.msra.mxu0 0.0
    %119 = vmatprep.subr.mxu0 0.0
    %120 = vmatpush2.msra.mxu0 0.0
    %121 = vmatprep.subr.mxu0 0.0
    %122 = vmatpush2.msra.mxu0 0.0
    %123 = vmatprep.subr.mxu0 0.0
    %124 = vmatpush2.msra.mxu0 0.0
    %125 = vmatprep.subr.mxu0 0.0
    %126 = vmatpush2.msra.mxu0 0.0
    %127 = vmatprep.subr.mxu0 0.0
    %128 = vmatpush2.msra.mxu0 0.0
    %129 = vmatprep.mubr.f32.mxu0 0.0
    %130 = vmatmul.mubr.f32.gmra.mxu0 %v54
    %v131 = vpop.f32.mrf.mxu0
    %v132 = vadd.f32 %v50, %v131
    %v133 = vpop.f32.mrf.mxu0
    %134 = vmatprep.mubr.f32.mxu0 0.0
    %135 = vmatmul.mubr.f32.gmra.mxu0 %v57
    %v136 = vpop.f32.mrf.mxu0
    %v137 = vadd.f32 %v50, %v136
    %v138 = vpop.f32.mrf.mxu0
    %139 = vmatprep.mubr.f32.mxu0 0.0
    %140 = vmatmul.mubr.f32.gmra.mxu0 %v60
    %v141 = vpop.f32.mrf.mxu0
    %v142 = vadd.f32 %v50, %v141
    %v143 = vpop.f32.mrf.mxu0
    %144 = vmatprep.mubr.f32.mxu0 0.0
    %145 = vmatmul.mubr.f32.gmra.mxu0 %v63
    %v146 = vpop.f32.mrf.mxu0
    %v147 = vadd.f32 %v50, %v146
    %v148 = vpop.f32.mrf.mxu0
    %149 = vdwg.mxu0
    %v150 = vmax.f32 %v132, 0.0
    %v151 = vmax.f32 %v137, 0.0
    %v152 = vmax.f32 %v142, 0.0
    %v153 = vmax.f32 %v147, 0.0
    %v154 = vld [vmem:[%s3] sm:$0xff]
    %v155 = vld [vmem:[%s3 + $0x8] sm:$0xff]
    %v156 = vld [vmem:[%s3 + $0x10] sm:$0xff]
    %v157 = vld [vmem:[%s3 + $0x18] sm:$0xff]
    %v158 = vld [vmem:[%s4] sm:$0xff]
    %v159 = vld [vmem:[%s4 + $0x8] sm:$0xff]
    %v160 = vld [vmem:[%s4 + $0x10] sm:$0xff]
    %v161 = vld [vmem:[%s4 + $0x18] sm:$0xff]
    %vm162 = vcmask 261120
    %v164 = vsel %vm162, %v150, 0
    %v167 = vsel %vm162, %v151, 0
    %v170 = vsel %vm162, %v152, 0
    %v173 = vsel %vm162, %v153, 0
    %175 = vmatprep.subr.mxu0 0.0
    %176 = vmatpush1.msra.mxu0 0.0
    %177 = vmatprep.subr.mxu0 0.0
    %178 = vmatpush1.msra.mxu0 0.0
    %179 = vmatprep.subr.mxu0 0.0
    %180 = vmatpush1.msra.mxu0 0.0
    %181 = vmatprep.subr.mxu0 0.0
    %182 = vmatpush1.msra.mxu0 0.0
    %183 = vmatprep.subr.mxu0 0.0
    %184 = vmatpush1.msra.mxu0 0.0
    %185 = vmatprep.subr.mxu0 0.0
    %186 = vmatpush1.msra.mxu0 0.0
    %187 = vmatprep.subr.mxu0 0.0
    %188 = vmatpush1.msra.mxu0 0.0
    %189 = vmatprep.subr.mxu0 0.0
    %190 = vmatpush1.msra.mxu0 0.0
    %191 = vmatprep.subr.mxu0 0.0
    %192 = vmatpush1.msra.mxu0 0.0
    %193 = vmatprep.subr.mxu0 0.0
    %194 = vmatpush1.msra.mxu0 0.0
    %195 = vmatprep.subr.mxu0 0.0
    %196 = vmatpush1.msra.mxu0 0.0
    %197 = vmatprep.subr.mxu0 0.0
    %198 = vmatpush1.msra.mxu0 0.0
    %199 = vmatprep.subr.mxu0 0.0
    %200 = vmatpush1.msra.mxu0 %v161
    %201 = vmatprep.subr.mxu0 0.0
    %202 = vmatpush1.msra.mxu0 %v160
    %203 = vmatprep.subr.mxu0 0.0
    %204 = vmatpush1.msra.mxu0 %v159
    %205 = vmatprep.subr.mxu0 0.0
    %206 = vmatpush1.msra.mxu0 %v158
    %207 = vmatprep.subr.mxu0 0.0
    %208 = vmatpush2.msra.mxu0 0.0
    %209 = vmatprep.subr.mxu0 0.0
    %210 = vmatpush2.msra.mxu0 0.0
    %211 = vmatprep.subr.mxu0 0.0
    %212 = vmatpush2.msra.mxu0 0.0
    %213 = vmatprep.subr.mxu0 0.0
    %214 = vmatpush2.msra.mxu0 0.0
    %215 = vmatprep.subr.mxu0 0.0
    %216 = vmatpush2.msra.mxu0 0.0
    %217 = vmatprep.subr.mxu0 0.0
    %218 = vmatpush2.msra.mxu0 0.0
    %219 = vmatprep.subr.mxu0 0.0
    %220 = vmatpush2.msra.mxu0 0.0
    %221 = vmatprep.subr.mxu0 0.0
    %222 = vmatpush2.msra.mxu0 0.0
    %223 = vmatprep.subr.mxu0 0.0
    %224 = vmatpush2.msra.mxu0 0.0
    %225 = vmatprep.subr.mxu0 0.0
    %226 = vmatpush2.msra.mxu0 0.0
    %227 = vmatprep.subr.mxu0 0.0
    %228 = vmatpush2.msra.mxu0 0.0
    %229 = vmatprep.subr.mxu0 0.0
    %230 = vmatpush2.msra.mxu0 0.0
    %231 = vmatprep.subr.mxu0 0.0
    %232 = vmatpush2.msra.mxu0 0.0
    %233 = vmatprep.subr.mxu0 0.0
    %234 = vmatpush2.msra.mxu0 0.0
    %235 = vmatprep.subr.mxu0 0.0
    %236 = vmatpush2.msra.mxu0 0.0
    %237 = vmatprep.subr.mxu0 0.0
    %238 = vmatpush2.msra.mxu0 0.0
    %239 = vmatprep.mubr.f32.mxu0 0.0
    %240 = vmatmul.mubr.f32.gmra.mxu0 %v164
    %v241 = vpop.f32.mrf.mxu0
    %v242 = vadd.f32 0.0, %v241
    %v243 = vpop.f32.mrf.mxu0
    %244 = vmatprep.mubr.f32.mxu0 0.0
    %245 = vmatmul.mubr.f32.gmra.mxu0 %v167
    %v246 = vpop.f32.mrf.mxu0
    %v247 = vadd.f32 0.0, %v246
    %v248 = vpop.f32.mrf.mxu0
    %249 = vmatprep.mubr.f32.mxu0 0.0
    %250 = vmatmul.mubr.f32.gmra.mxu0 %v170
    %v251 = vpop.f32.mrf.mxu0
    %v252 = vadd.f32 0.0, %v251
    %v253 = vpop.f32.mrf.mxu0
    %254 = vmatprep.mubr.f32.mxu0 0.0
    %255 = vmatmul.mubr.f32.gmra.mxu0 %v173
    %v256 = vpop.f32.mrf.mxu0
    %v257 = vadd.f32 0.0, %v256
    %v258 = vpop.f32.mrf.mxu0
    %259 = vdwg.mxu0
    %260 = vxpose.xlu0.b32.start [1/16] %v154, 128
    %261 = vxpose.xlu0.b32.cont [2/16] %v155, 128
    %262 = vxpose.xlu0.b32.cont [3/16] %v156, 128
    %263 = vxpose.xlu0.b32.cont [4/16] %v157, 128
    %264 = vxpose.xlu0.b32.cont [5/16] 0.0, 128
    %265 = vxpose.xlu0.b32.cont [6/16] 0.0, 128
    %266 = vxpose.xlu0.b32.cont [7/16] 0.0, 128
    %267 = vxpose.xlu0.b32.cont [8/16] 0.0, 128
    %268 = vxpose.xlu0.b32.cont [9/16] 0.0, 128
    %269 = vxpose.xlu0.b32.cont [10/16] 0.0, 128
    %270 = vxpose.xlu0.b32.cont [11/16] 0.0, 128
    %271 = vxpose.xlu0.b32.cont [12/16] 0.0, 128
    %272 = vxpose.xlu0.b32.cont [13/16] 0.0, 128
    %273 = vxpose.xlu0.b32.cont [14/16] 0.0, 128
    %274 = vxpose.xlu0.b32.cont [15/16] 0.0, 128
    %275 = vxpose.xlu0.b32.end [16/16] 0.0, 128
    %v276 = vpop.trf.xlu0
    %v277 = vpop.trf.xlu0
    %v278 = vpop.trf.xlu0
    %v279 = vpop.trf.xlu0
    %v280 = vpop.trf.xlu0
    %v281 = vpop.trf.xlu0
    %v282 = vpop.trf.xlu0
    %v283 = vpop.trf.xlu0
    %v284 = vpop.trf.xlu0
    %v285 = vpop.trf.xlu0
    %v286 = vpop.trf.xlu0
    %v287 = vpop.trf.xlu0
    %v288 = vpop.trf.xlu0
    %v289 = vpop.trf.xlu0
    %v290 = vpop.trf.xlu0
    %v291 = vpop.trf.xlu0
    %v293 = vsel %vm162, %v276, 0
    %295 = vmatprep.subr.mxu0 0.0
    %296 = vmatpush1.msra.mxu0 0.0
    %297 = vmatprep.subr.mxu0 0.0
    %298 = vmatpush1.msra.mxu0 0.0
    %299 = vmatprep.subr.mxu0 0.0
    %300 = vmatpush1.msra.mxu0 0.0
    %301 = vmatprep.subr.mxu0 0.0
    %302 = vmatpush1.msra.mxu0 0.0
    %303 = vmatprep.subr.mxu0 0.0
    %304 = vmatpush1.msra.mxu0 0.0
    %305 = vmatprep.subr.mxu0 0.0
    %306 = vmatpush1.msra.mxu0 0.0
    %307 = vmatprep.subr.mxu0 0.0
    %308 = vmatpush1.msra.mxu0 0.0
    %309 = vmatprep.subr.mxu0 0.0
    %310 = vmatpush1.msra.mxu0 0.0
    %311 = vmatprep.subr.mxu0 0.0
    %312 = vmatpush1.msra.mxu0 0.0
    %313 = vmatprep.subr.mxu0 0.0
    %314 = vmatpush1.msra.mxu0 0.0
    %315 = vmatprep.subr.mxu0 0.0
    %316 = vmatpush1.msra.mxu0 0.0
    %317 = vmatprep.subr.mxu0 0.0
    %318 = vmatpush1.msra.mxu0 0.0
    %319 = vmatprep.subr.mxu0 0.0
    %320 = vmatpush1.msra.mxu0 %v257
    %321 = vmatprep.subr.mxu0 0.0
    %322 = vmatpush1.msra.mxu0 %v252
    %323 = vmatprep.subr.mxu0 0.0
    %324 = vmatpush1.msra.mxu0 %v247
    %325 = vmatprep.subr.mxu0 0.0
    %326 = vmatpush1.msra.mxu0 %v242
    %327 = vmatprep.subr.mxu0 0.0
    %328 = vmatpush2.msra.mxu0 0.0
    %329 = vmatprep.subr.mxu0 0.0
    %330 = vmatpush2.msra.mxu0 0.0
    %331 = vmatprep.subr.mxu0 0.0
    %332 = vmatpush2.msra.mxu0 0.0
    %333 = vmatprep.subr.mxu0 0.0
    %334 = vmatpush2.msra.mxu0 0.0
    %335 = vmatprep.subr.mxu0 0.0
    %336 = vmatpush2.msra.mxu0 0.0
    %337 = vmatprep.subr.mxu0 0.0
    %338 = vmatpush2.msra.mxu0 0.0
    %339 = vmatprep.subr.mxu0 0.0
    %340 = vmatpush2.msra.mxu0 0.0
    %341 = vmatprep.subr.mxu0 0.0
    %342 = vmatpush2.msra.mxu0 0.0
    %343 = vmatprep.subr.mxu0 0.0
    %344 = vmatpush2.msra.mxu0 0.0
    %345 = vmatprep.subr.mxu0 0.0
    %346 = vmatpush2.msra.mxu0 0.0
    %347 = vmatprep.subr.mxu0 0.0
    %348 = vmatpush2.msra.mxu0 0.0
    %349 = vmatprep.subr.mxu0 0.0
    %350 = vmatpush2.msra.mxu0 0.0
    %351 = vmatprep.subr.mxu0 0.0
    %352 = vmatpush2.msra.mxu0 0.0
    %353 = vmatprep.subr.mxu0 0.0
    %354 = vmatpush2.msra.mxu0 0.0
    %355 = vmatprep.subr.mxu0 0.0
    %356 = vmatpush2.msra.mxu0 0.0
    %357 = vmatprep.subr.mxu0 0.0
    %358 = vmatpush2.msra.mxu0 0.0
    %359 = vmatprep.mubr.f32.mxu0 0.0
    %360 = vmatmul.mubr.f32.gmra.mxu0 %v293
    %v361 = vpop.f32.mrf.mxu0
    %v362 = vadd.f32 0.0, %v361
    %v363 = vpop.f32.mrf.mxu0
    %364 = vdwg.mxu0
    %vm365 = vcmask 48128
    %v366 = vsel %vm365, %v154, 0.0
    %v367 = vsel %vm365, %v155, 0.0
    %v368 = vadd.f32 %v366, %v367
    %v369 = vsel %vm365, %v156, 0.0
    %v370 = vadd.f32 %v368, %v369
    %v371 = vsel %vm365, %v157, 0.0
    %v372 = vadd.f32 %v370, %v371
    %v373 = vrot.slane %v372, 4
    %v374 = vadd.f32 %v372, %v373
    %v375 = vrot.slane %v374, 2
    %v376 = vadd.f32 %v374, %v375
    %v377 = vrot.slane %v376, 1
    %v378 = vadd.f32 %v376, %v377
    %380 = vbcast.lane.b32.xlu0 %v378, 256
    %v381 = vpop.permute.xlu0 %380
    %vm382 = vcmp.gt.f32.partialorder %v381, 0.0
    %v383 = vrcp.pop %v381
    %v384 = vmul.f32 1.0, %v383
    %v385 = vsel %vm382, %v384, 0.0
    %v386 = vmul.f32 %v362, %v385
    %387 = vadd.xlane.f32.xlu0 %v366
    %v388 = vpop.xlane.xlu0 %387
    %389 = vadd.xlane.f32.xlu0 %v367
    %v390 = vpop.xlane.xlu0 %389
    %391 = vadd.xlane.f32.xlu0 %v369
    %v392 = vpop.xlane.xlu0 %391
    %393 = vadd.xlane.f32.xlu0 %v371
    %v394 = vpop.xlane.xlu0 %393
    %vm395 = vcmp.gt.f32.partialorder %v388, 0.0
    %vm396 = vcmp.gt.f32.partialorder %v390, 0.0
    %vm397 = vcmp.gt.f32.partialorder %v392, 0.0
    %vm398 = vcmp.gt.f32.partialorder %v394, 0.0
    %v399 = vrcp.pop %v388
    %v400 = vmul.f32 1.0, %v399
    %v401 = vrcp.pop %v390
    %v402 = vmul.f32 1.0, %v401
    %v403 = vrcp.pop %v392
    %v404 = vmul.f32 1.0, %v403
    %v405 = vrcp.pop %v394
    %v406 = vmul.f32 1.0, %v405
    %v407 = vsel %vm395, %v400, 0.0
    %v408 = vsel %vm396, %v402, 0.0
    %v409 = vsel %vm397, %v404, 0.0
    %v410 = vsel %vm398, %v406, 0.0
    %v412 = vsel %vm365, %v154, 0
    %v415 = vsel %vm365, %v155, 0
    %v418 = vsel %vm365, %v156, 0
    %v421 = vsel %vm365, %v157, 0
    %vm423 = vcmask 1045504
    %v425 = vsel %vm423, %v386, 0
    %427 = vmatprep.subr.mxu0 0.0
    %428 = vmatpush1.msra.mxu0 0.0
    %429 = vmatprep.subr.mxu0 0.0
    %430 = vmatpush1.msra.mxu0 0.0
    %431 = vmatprep.subr.mxu0 0.0
    %432 = vmatpush1.msra.mxu0 0.0
    %433 = vmatprep.subr.mxu0 0.0
    %434 = vmatpush1.msra.mxu0 0.0
    %435 = vmatprep.subr.mxu0 0.0
    %436 = vmatpush1.msra.mxu0 0.0
    %437 = vmatprep.subr.mxu0 0.0
    %438 = vmatpush1.msra.mxu0 0.0
    %439 = vmatprep.subr.mxu0 0.0
    %440 = vmatpush1.msra.mxu0 0.0
    %441 = vmatprep.subr.mxu0 0.0
    %442 = vmatpush1.msra.mxu0 0.0
    %443 = vmatprep.subr.mxu0 0.0
    %444 = vmatpush1.msra.mxu0 0.0
    %445 = vmatprep.subr.mxu0 0.0
    %446 = vmatpush1.msra.mxu0 0.0
    %447 = vmatprep.subr.mxu0 0.0
    %448 = vmatpush1.msra.mxu0 0.0
    %449 = vmatprep.subr.mxu0 0.0
    %450 = vmatpush1.msra.mxu0 0.0
    %451 = vmatprep.subr.mxu0 0.0
    %452 = vmatpush1.msra.mxu0 0.0
    %453 = vmatprep.subr.mxu0 0.0
    %454 = vmatpush1.msra.mxu0 0.0
    %455 = vmatprep.subr.mxu0 0.0
    %456 = vmatpush1.msra.mxu0 0.0
    %457 = vmatprep.subr.mxu0 0.0
    %458 = vmatpush1.msra.mxu0 %v425
    %459 = vmatprep.subr.mxu0 0.0
    %460 = vmatpush2.msra.mxu0 0.0
    %461 = vmatprep.subr.mxu0 0.0
    %462 = vmatpush2.msra.mxu0 0.0
    %463 = vmatprep.subr.mxu0 0.0
    %464 = vmatpush2.msra.mxu0 0.0
    %465 = vmatprep.subr.mxu0 0.0
    %466 = vmatpush2.msra.mxu0 0.0
    %467 = vmatprep.subr.mxu0 0.0
    %468 = vmatpush2.msra.mxu0 0.0
    %469 = vmatprep.subr.mxu0 0.0
    %470 = vmatpush2.msra.mxu0 0.0
    %471 = vmatprep.subr.mxu0 0.0
    %472 = vmatpush2.msra.mxu0 0.0
    %473 = vmatprep.subr.mxu0 0.0
    %474 = vmatpush2.msra.mxu0 0.0
    %475 = vmatprep.subr.mxu0 0.0
    %476 = vmatpush2.msra.mxu0 0.0
    %477 = vmatprep.subr.mxu0 0.0
    %478 = vmatpush2.msra.mxu0 0.0
    %479 = vmatprep.subr.mxu0 0.0
    %480 = vmatpush2.msra.mxu0 0.0
    %481 = vmatprep.subr.mxu0 0.0
    %482 = vmatpush2.msra.mxu0 0.0
    %483 = vmatprep.subr.mxu0 0.0
    %484 = vmatpush2.msra.mxu0 0.0
    %485 = vmatprep.subr.mxu0 0.0
    %486 = vmatpush2.msra.mxu0 0.0
    %487 = vmatprep.subr.mxu0 0.0
    %488 = vmatpush2.msra.mxu0 0.0
    %489 = vmatprep.subr.mxu0 0.0
    %490 = vmatpush2.msra.mxu0 0.0
    %491 = vmatprep.mubr.f32.mxu0 0.0
    %492 = vmatmul.mubr.f32.gmra.mxu0 %v412
    %v493 = vpop.f32.mrf.mxu0
    %v494 = vadd.f32 0.0, %v493
    %v495 = vpop.f32.mrf.mxu0
    %496 = vmatprep.mubr.f32.mxu0 0.0
    %497 = vmatmul.mubr.f32.gmra.mxu0 %v415
    %v498 = vpop.f32.mrf.mxu0
    %v499 = vadd.f32 0.0, %v498
    %v500 = vpop.f32.mrf.mxu0
    %501 = vmatprep.mubr.f32.mxu0 0.0
    %502 = vmatmul.mubr.f32.gmra.mxu0 %v418
    %v503 = vpop.f32.mrf.mxu0
    %v504 = vadd.f32 0.0, %v503
    %v505 = vpop.f32.mrf.mxu0
    %506 = vmatprep.mubr.f32.mxu0 0.0
    %507 = vmatmul.mubr.f32.gmra.mxu0 %v421
    %v508 = vpop.f32.mrf.mxu0
    %v509 = vadd.f32 0.0, %v508
    %v510 = vpop.f32.mrf.mxu0
    %511 = vdwg.mxu0
    %v512 = vmul.f32 %v494, %v407
    %v513 = vmul.f32 %v499, %v408
    %v514 = vmul.f32 %v504, %v409
    %v515 = vmul.f32 %v509, %v410
    %v516 = vld [vmem:[%s5] sm:$0x1]
    %v518 = vlaneseq
    %v519 = vshrl.u32 %v518, 7
    %v520 = vsub.s32 0, %v519
    %v521 = vrot.slane %v516, %v520
    %v523 = vadd.f32 %v512, %v521
    %v524 = vadd.f32 %v513, %v521
    %v525 = vadd.f32 %v514, %v521
    %v526 = vadd.f32 %v515, %v521
    %v527 = vld [vmem:[%s6] sm:$0xff]
    %v528 = vld [vmem:[%s6 + $0x8] sm:$0xff]
    %v529 = vld [vmem:[%s6 + $0x10] sm:$0xff]
    %v530 = vld [vmem:[%s6 + $0x18] sm:$0xff]
    %v531 = vld [vmem:[%s7] sm:$0x1]
    %v533 = vlaneseq
    %v534 = vshrl.u32 %v533, 7
    %v535 = vsub.s32 0, %v534
    %v536 = vrot.slane %v531, %v535
    %538 = vmatprep.subr.mxu0 0.0
    %539 = vmatpush1.msra.mxu0 0.0
    %540 = vmatprep.subr.mxu0 0.0
    %541 = vmatpush1.msra.mxu0 0.0
    %542 = vmatprep.subr.mxu0 0.0
    %543 = vmatpush1.msra.mxu0 0.0
    %544 = vmatprep.subr.mxu0 0.0
    %545 = vmatpush1.msra.mxu0 0.0
    %546 = vmatprep.subr.mxu0 0.0
    %547 = vmatpush1.msra.mxu0 0.0
    %548 = vmatprep.subr.mxu0 0.0
    %549 = vmatpush1.msra.mxu0 0.0
    %550 = vmatprep.subr.mxu0 0.0
    %551 = vmatpush1.msra.mxu0 0.0
    %552 = vmatprep.subr.mxu0 0.0
    %553 = vmatpush1.msra.mxu0 0.0
    %554 = vmatprep.subr.mxu0 0.0
    %555 = vmatpush1.msra.mxu0 0.0
    %556 = vmatprep.subr.mxu0 0.0
    %557 = vmatpush1.msra.mxu0 0.0
    %558 = vmatprep.subr.mxu0 0.0
    %559 = vmatpush1.msra.mxu0 0.0
    %560 = vmatprep.subr.mxu0 0.0
    %561 = vmatpush1.msra.mxu0 0.0
    %562 = vmatprep.subr.mxu0 0.0
    %563 = vmatpush1.msra.mxu0 %v530
    %564 = vmatprep.subr.mxu0 0.0
    %565 = vmatpush1.msra.mxu0 %v529
    %566 = vmatprep.subr.mxu0 0.0
    %567 = vmatpush1.msra.mxu0 %v528
    %568 = vmatprep.subr.mxu0 0.0
    %569 = vmatpush1.msra.mxu0 %v527
    %570 = vmatprep.subr.mxu0 0.0
    %571 = vmatpush2.msra.mxu0 0.0
    %572 = vmatprep.subr.mxu0 0.0
    %573 = vmatpush2.msra.mxu0 0.0
    %574 = vmatprep.subr.mxu0 0.0
    %575 = vmatpush2.msra.mxu0 0.0
    %576 = vmatprep.subr.mxu0 0.0
    %577 = vmatpush2.msra.mxu0 0.0
    %578 = vmatprep.subr.mxu0 0.0
    %579 = vmatpush2.msra.mxu0 0.0
    %580 = vmatprep.subr.mxu0 0.0
    %581 = vmatpush2.msra.mxu0 0.0
    %582 = vmatprep.subr.mxu0 0.0
    %583 = vmatpush2.msra.mxu0 0.0
    %584 = vmatprep.subr.mxu0 0.0
    %585 = vmatpush2.msra.mxu0 0.0
    %586 = vmatprep.subr.mxu0 0.0
    %587 = vmatpush2.msra.mxu0 0.0
    %588 = vmatprep.subr.mxu0 0.0
    %589 = vmatpush2.msra.mxu0 0.0
    %590 = vmatprep.subr.mxu0 0.0
    %591 = vmatpush2.msra.mxu0 0.0
    %592 = vmatprep.subr.mxu0 0.0
    %593 = vmatpush2.msra.mxu0 0.0
    %594 = vmatprep.subr.mxu0 0.0
    %595 = vmatpush2.msra.mxu0 0.0
    %596 = vmatprep.subr.mxu0 0.0
    %597 = vmatpush2.msra.mxu0 0.0
    %598 = vmatprep.subr.mxu0 0.0
    %599 = vmatpush2.msra.mxu0 0.0
    %600 = vmatprep.subr.mxu0 0.0
    %601 = vmatpush2.msra.mxu0 0.0
    %602 = vmatprep.mubr.f32.mxu0 0.0
    %603 = vmatmul.mubr.f32.gmra.mxu0 %v164
    %v604 = vpop.f32.mrf.mxu0
    %v605 = vadd.f32 %v536, %v604
    %v606 = vpop.f32.mrf.mxu0
    %607 = vmatprep.mubr.f32.mxu0 0.0
    %608 = vmatmul.mubr.f32.gmra.mxu0 %v167
    %v609 = vpop.f32.mrf.mxu0
    %v610 = vadd.f32 %v536, %v609
    %v611 = vpop.f32.mrf.mxu0
    %612 = vmatprep.mubr.f32.mxu0 0.0
    %613 = vmatmul.mubr.f32.gmra.mxu0 %v170
    %v614 = vpop.f32.mrf.mxu0
    %v615 = vadd.f32 %v536, %v614
    %v616 = vpop.f32.mrf.mxu0
    %617 = vmatprep.mubr.f32.mxu0 0.0
    %618 = vmatmul.mubr.f32.gmra.mxu0 %v173
    %v619 = vpop.f32.mrf.mxu0
    %v620 = vadd.f32 %v536, %v619
    %v621 = vpop.f32.mrf.mxu0
    %622 = vdwg.mxu0
    %v623 = vld [vmem:[%s8] sm:$0xff]
    %v624 = vld [vmem:[%s8 + $0x8] sm:$0xff]
    %v625 = vld [vmem:[%s8 + $0x10] sm:$0xff]
    %v626 = vld [vmem:[%s8 + $0x18] sm:$0xff]
    %v627 = vld [vmem:[%s9] sm:$0x1]
    %v629 = vlaneseq
    %v630 = vshrl.u32 %v629, 7
    %v631 = vsub.s32 0, %v630
    %v632 = vrot.slane %v627, %v631
    %v635 = vsel %vm162, %v523, 0
    %v638 = vsel %vm162, %v524, 0
    %v641 = vsel %vm162, %v525, 0
    %v644 = vsel %vm162, %v526, 0
    %646 = vmatprep.subr.mxu0 0.0
    %647 = vmatpush1.msra.mxu0 0.0
    %648 = vmatprep.subr.mxu0 0.0
    %649 = vmatpush1.msra.mxu0 0.0
    %650 = vmatprep.subr.mxu0 0.0
    %651 = vmatpush1.msra.mxu0 0.0
    %652 = vmatprep.subr.mxu0 0.0
    %653 = vmatpush1.msra.mxu0 0.0
    %654 = vmatprep.subr.mxu0 0.0
    %655 = vmatpush1.msra.mxu0 0.0
    %656 = vmatprep.subr.mxu0 0.0
    %657 = vmatpush1.msra.mxu0 0.0
    %658 = vmatprep.subr.mxu0 0.0
    %659 = vmatpush1.msra.mxu0 0.0
    %660 = vmatprep.subr.mxu0 0.0
    %661 = vmatpush1.msra.mxu0 0.0
    %662 = vmatprep.subr.mxu0 0.0
    %663 = vmatpush1.msra.mxu0 0.0
    %664 = vmatprep.subr.mxu0 0.0
    %665 = vmatpush1.msra.mxu0 0.0
    %666 = vmatprep.subr.mxu0 0.0
    %667 = vmatpush1.msra.mxu0 0.0
    %668 = vmatprep.subr.mxu0 0.0
    %669 = vmatpush1.msra.mxu0 0.0
    %670 = vmatprep.subr.mxu0 0.0
    %671 = vmatpush1.msra.mxu0 %v626
    %672 = vmatprep.subr.mxu0 0.0
    %673 = vmatpush1.msra.mxu0 %v625
    %674 = vmatprep.subr.mxu0 0.0
    %675 = vmatpush1.msra.mxu0 %v624
    %676 = vmatprep.subr.mxu0 0.0
    %677 = vmatpush1.msra.mxu0 %v623
    %678 = vmatprep.subr.mxu0 0.0
    %679 = vmatpush2.msra.mxu0 0.0
    %680 = vmatprep.subr.mxu0 0.0
    %681 = vmatpush2.msra.mxu0 0.0
    %682 = vmatprep.subr.mxu0 0.0
    %683 = vmatpush2.msra.mxu0 0.0
    %684 = vmatprep.subr.mxu0 0.0
    %685 = vmatpush2.msra.mxu0 0.0
    %686 = vmatprep.subr.mxu0 0.0
    %687 = vmatpush2.msra.mxu0 0.0
    %688 = vmatprep.subr.mxu0 0.0
    %689 = vmatpush2.msra.mxu0 0.0
    %690 = vmatprep.subr.mxu0 0.0
    %691 = vmatpush2.msra.mxu0 0.0
    %692 = vmatprep.subr.mxu0 0.0
    %693 = vmatpush2.msra.mxu0 0.0
    %694 = vmatprep.subr.mxu0 0.0
    %695 = vmatpush2.msra.mxu0 0.0
    %696 = vmatprep.subr.mxu0 0.0
    %697 = vmatpush2.msra.mxu0 0.0
    %698 = vmatprep.subr.mxu0 0.0
    %699 = vmatpush2.msra.mxu0 0.0
    %700 = vmatprep.subr.mxu0 0.0
    %701 = vmatpush2.msra.mxu0 0.0
    %702 = vmatprep.subr.mxu0 0.0
    %703 = vmatpush2.msra.mxu0 0.0
    %704 = vmatprep.subr.mxu0 0.0
    %705 = vmatpush2.msra.mxu0 0.0
    %706 = vmatprep.subr.mxu0 0.0
    %707 = vmatpush2.msra.mxu0 0.0
    %708 = vmatprep.subr.mxu0 0.0
    %709 = vmatpush2.msra.mxu0 0.0
    %710 = vmatprep.mubr.f32.mxu0 0.0
    %711 = vmatmul.mubr.f32.gmra.mxu0 %v635
    %v712 = vpop.f32.mrf.mxu0
    %v713 = vadd.f32 %v632, %v712
    %v714 = vpop.f32.mrf.mxu0
    %715 = vmatprep.mubr.f32.mxu0 0.0
    %716 = vmatmul.mubr.f32.gmra.mxu0 %v638
    %v717 = vpop.f32.mrf.mxu0
    %v718 = vadd.f32 %v632, %v717
    %v719 = vpop.f32.mrf.mxu0
    %720 = vmatprep.mubr.f32.mxu0 0.0
    %721 = vmatmul.mubr.f32.gmra.mxu0 %v641
    %v722 = vpop.f32.mrf.mxu0
    %v723 = vadd.f32 %v632, %v722
    %v724 = vpop.f32.mrf.mxu0
    %725 = vmatprep.mubr.f32.mxu0 0.0
    %726 = vmatmul.mubr.f32.gmra.mxu0 %v644
    %v727 = vpop.f32.mrf.mxu0
    %v728 = vadd.f32 %v632, %v727
    %v729 = vpop.f32.mrf.mxu0
    %730 = vdwg.mxu0
    %v731 = vadd.f32 %v605, %v713
    %v732 = vadd.f32 %v610, %v718
    %v733 = vadd.f32 %v615, %v723
    %v734 = vadd.f32 %v620, %v728
    %v735 = vld [vmem:[%s10] sm:$0xff]
    %v736 = vlaneseq
    %v737 = vshrl.u32 %v736, 7
    %v738 = vsub.s32 0, %v737
    %v739 = vrot.slane %v735, %v738
    %741 = vbcast.lane.b32.xlu0 %v739, 256
    %v742 = vpop.permute.xlu0 %741
    %s744 = sor.u32 256, 8
    %745 = vbcast.lane.b32.xlu0 %v739, %s744
    %v746 = vpop.permute.xlu0 %745
    %s748 = sor.u32 256, 16
    %749 = vbcast.lane.b32.xlu0 %v739, %s748
    %v750 = vpop.permute.xlu0 %749
    %s752 = sor.u32 256, 24
    %753 = vbcast.lane.b32.xlu0 %v739, %s752
    %v754 = vpop.permute.xlu0 %753
    %vm755 = vcmp.gt.f32.partialorder %v742, 0.0
    %vm756 = vcmp.gt.f32.partialorder %v746, 0.0
    %vm757 = vcmp.gt.f32.partialorder %v750, 0.0
    %vm758 = vcmp.gt.f32.partialorder %v754, 0.0
    %v759 = vsel %vm755, 1, 0
    %v760 = vsel %vm756, 1, 0
    %v761 = vsel %vm757, 1, 0
    %v762 = vsel %vm758, 1, 0
    %vm763 = vcmp.eq.s32.totalorder %v759, 1
    %vm764 = vcmp.eq.s32.totalorder %v760, 1
    %vm765 = vcmp.eq.s32.totalorder %v761, 1
    %vm766 = vcmp.eq.s32.totalorder %v762, 1
    %v767 = vsel %vm763, %v731, -1e+30
    %v768 = vsel %vm764, %v732, -1e+30
    %v769 = vsel %vm765, %v733, -1e+30
    %v770 = vsel %vm766, %v734, -1e+30
    %vm771 = vcmask 64512
    %v772 = vsel %vm771, %v767, -inf
    %v773 = vsel %vm771, %v768, -inf
    %v774 = vsel %vm771, %v769, -inf
    %v775 = vsel %vm771, %v770, -inf
    %v776 = vmax.f32 %v772, %v773
    %v777 = vmax.f32 %v774, %v775
    %v778 = vmax.f32 %v776, %v777
    %v779 = vrot.slane %v778, 4
    %v780 = vmax.f32 %v778, %v779
    %v781 = vrot.slane %v780, 2
    %v782 = vmax.f32 %v780, %v781
    %v783 = vrot.slane %v782, 1
    %v784 = vmax.f32 %v782, %v783
    %v785 = vlaneseq
    %v786 = vshrl.u32 %v785, 7
    %v787 = vsub.s32 1, %v786
    %v788 = vrot.slane %v735, %v787
    %790 = vbcast.lane.b32.xlu0 %v788, 256
    %v791 = vpop.permute.xlu0 %790
    %s793 = sor.u32 256, 8
    %794 = vbcast.lane.b32.xlu0 %v788, %s793
    %v795 = vpop.permute.xlu0 %794
    %s797 = sor.u32 256, 16
    %798 = vbcast.lane.b32.xlu0 %v788, %s797
    %v799 = vpop.permute.xlu0 %798
    %s801 = sor.u32 256, 24
    %802 = vbcast.lane.b32.xlu0 %v788, %s801
    %v803 = vpop.permute.xlu0 %802
    %vm804 = vcmp.gt.f32.partialorder %v791, 0.0
    %vm805 = vcmp.gt.f32.partialorder %v795, 0.0
    %vm806 = vcmp.gt.f32.partialorder %v799, 0.0
    %vm807 = vcmp.gt.f32.partialorder %v803, 0.0
    %v808 = vsel %vm804, 1, 0
    %v809 = vsel %vm805, 1, 0
    %v810 = vsel %vm806, 1, 0
    %v811 = vsel %vm807, 1, 0
    %vm812 = vcmp.eq.s32.totalorder %v808, 1
    %vm813 = vcmp.eq.s32.totalorder %v809, 1
    %vm814 = vcmp.eq.s32.totalorder %v810, 1
    %vm815 = vcmp.eq.s32.totalorder %v811, 1
    %v816 = vsel %vm812, %v731, -1e+30
    %v817 = vsel %vm813, %v732, -1e+30
    %v818 = vsel %vm814, %v733, -1e+30
    %v819 = vsel %vm815, %v734, -1e+30
    %v820 = vsel %vm771, %v816, -inf
    %v821 = vsel %vm771, %v817, -inf
    %v822 = vsel %vm771, %v818, -inf
    %v823 = vsel %vm771, %v819, -inf
    %v824 = vmax.f32 %v820, %v821
    %v825 = vmax.f32 %v822, %v823
    %v826 = vmax.f32 %v824, %v825
    %v827 = vrot.slane %v826, 4
    %v828 = vmax.f32 %v826, %v827
    %v829 = vrot.slane %v828, 2
    %v830 = vmax.f32 %v828, %v829
    %v831 = vrot.slane %v830, 1
    %v832 = vmax.f32 %v830, %v831
    %v833 = vlaneseq
    %v834 = vshrl.u32 %v833, 7
    %v835 = vsub.s32 2, %v834
    %v836 = vrot.slane %v735, %v835
    %838 = vbcast.lane.b32.xlu0 %v836, 256
    %v839 = vpop.permute.xlu0 %838
    %s841 = sor.u32 256, 8
    %842 = vbcast.lane.b32.xlu0 %v836, %s841
    %v843 = vpop.permute.xlu0 %842
    %s845 = sor.u32 256, 16
    %846 = vbcast.lane.b32.xlu0 %v836, %s845
    %v847 = vpop.permute.xlu0 %846
    %s849 = sor.u32 256, 24
    %850 = vbcast.lane.b32.xlu0 %v836, %s849
    %v851 = vpop.permute.xlu0 %850
    %vm852 = vcmp.gt.f32.partialorder %v839, 0.0
    %vm853 = vcmp.gt.f32.partialorder %v843, 0.0
    %vm854 = vcmp.gt.f32.partialorder %v847, 0.0
    %vm855 = vcmp.gt.f32.partialorder %v851, 0.0
    %v856 = vsel %vm852, 1, 0
    %v857 = vsel %vm853, 1, 0
    %v858 = vsel %vm854, 1, 0
    %v859 = vsel %vm855, 1, 0
    %vm860 = vcmp.eq.s32.totalorder %v856, 1
    %vm861 = vcmp.eq.s32.totalorder %v857, 1
    %vm862 = vcmp.eq.s32.totalorder %v858, 1
    %vm863 = vcmp.eq.s32.totalorder %v859, 1
    %v864 = vsel %vm860, %v731, -1e+30
    %v865 = vsel %vm861, %v732, -1e+30
    %v866 = vsel %vm862, %v733, -1e+30
    %v867 = vsel %vm863, %v734, -1e+30
    %v868 = vsel %vm771, %v864, -inf
    %v869 = vsel %vm771, %v865, -inf
    %v870 = vsel %vm771, %v866, -inf
    %v871 = vsel %vm771, %v867, -inf
    %v872 = vmax.f32 %v868, %v869
    %v873 = vmax.f32 %v870, %v871
    %v874 = vmax.f32 %v872, %v873
    %v875 = vrot.slane %v874, 4
    %v876 = vmax.f32 %v874, %v875
    %v877 = vrot.slane %v876, 2
    %v878 = vmax.f32 %v876, %v877
    %v879 = vrot.slane %v878, 1
    %v880 = vmax.f32 %v878, %v879
    %v881 = vlaneseq
    %v882 = vshrl.u32 %v881, 7
    %v883 = vsub.s32 3, %v882
    %v884 = vrot.slane %v735, %v883
    %886 = vbcast.lane.b32.xlu0 %v884, 256
    %v887 = vpop.permute.xlu0 %886
    %s889 = sor.u32 256, 8
    %890 = vbcast.lane.b32.xlu0 %v884, %s889
    %v891 = vpop.permute.xlu0 %890
    %s893 = sor.u32 256, 16
    %894 = vbcast.lane.b32.xlu0 %v884, %s893
    %v895 = vpop.permute.xlu0 %894
    %s897 = sor.u32 256, 24
    %898 = vbcast.lane.b32.xlu0 %v884, %s897
    %v899 = vpop.permute.xlu0 %898
    %vm900 = vcmp.gt.f32.partialorder %v887, 0.0
    %vm901 = vcmp.gt.f32.partialorder %v891, 0.0
    %vm902 = vcmp.gt.f32.partialorder %v895, 0.0
    %vm903 = vcmp.gt.f32.partialorder %v899, 0.0
    %v904 = vsel %vm900, 1, 0
    %v905 = vsel %vm901, 1, 0
    %v906 = vsel %vm902, 1, 0
    %v907 = vsel %vm903, 1, 0
    %vm908 = vcmp.eq.s32.totalorder %v904, 1
    %vm909 = vcmp.eq.s32.totalorder %v905, 1
    %vm910 = vcmp.eq.s32.totalorder %v906, 1
    %vm911 = vcmp.eq.s32.totalorder %v907, 1
    %v912 = vsel %vm908, %v731, -1e+30
    %v913 = vsel %vm909, %v732, -1e+30
    %v914 = vsel %vm910, %v733, -1e+30
    %v915 = vsel %vm911, %v734, -1e+30
    %v916 = vsel %vm771, %v912, -inf
    %v917 = vsel %vm771, %v913, -inf
    %v918 = vsel %vm771, %v914, -inf
    %v919 = vsel %vm771, %v915, -inf
    %v920 = vmax.f32 %v916, %v917
    %v921 = vmax.f32 %v918, %v919
    %v922 = vmax.f32 %v920, %v921
    %v923 = vrot.slane %v922, 4
    %v924 = vmax.f32 %v922, %v923
    %v925 = vrot.slane %v924, 2
    %v926 = vmax.f32 %v924, %v925
    %v927 = vrot.slane %v926, 1
    %v928 = vmax.f32 %v926, %v927
    %v929 = vlaneseq
    %v930 = vshrl.u32 %v929, 7
    %v931 = vsub.s32 4, %v930
    %v932 = vrot.slane %v735, %v931
    %934 = vbcast.lane.b32.xlu0 %v932, 256
    %v935 = vpop.permute.xlu0 %934
    %s937 = sor.u32 256, 8
    %938 = vbcast.lane.b32.xlu0 %v932, %s937
    %v939 = vpop.permute.xlu0 %938
    %s941 = sor.u32 256, 16
    %942 = vbcast.lane.b32.xlu0 %v932, %s941
    %v943 = vpop.permute.xlu0 %942
    %s945 = sor.u32 256, 24
    %946 = vbcast.lane.b32.xlu0 %v932, %s945
    %v947 = vpop.permute.xlu0 %946
    %vm948 = vcmp.gt.f32.partialorder %v935, 0.0
    %vm949 = vcmp.gt.f32.partialorder %v939, 0.0
    %vm950 = vcmp.gt.f32.partialorder %v943, 0.0
    %vm951 = vcmp.gt.f32.partialorder %v947, 0.0
    %v952 = vsel %vm948, 1, 0
    %v953 = vsel %vm949, 1, 0
    %v954 = vsel %vm950, 1, 0
    %v955 = vsel %vm951, 1, 0
    %vm956 = vcmp.eq.s32.totalorder %v952, 1
    %vm957 = vcmp.eq.s32.totalorder %v953, 1
    %vm958 = vcmp.eq.s32.totalorder %v954, 1
    %vm959 = vcmp.eq.s32.totalorder %v955, 1
    %v960 = vsel %vm956, %v731, -1e+30
    %v961 = vsel %vm957, %v732, -1e+30
    %v962 = vsel %vm958, %v733, -1e+30
    %v963 = vsel %vm959, %v734, -1e+30
    %v964 = vsel %vm771, %v960, -inf
    %v965 = vsel %vm771, %v961, -inf
    %v966 = vsel %vm771, %v962, -inf
    %v967 = vsel %vm771, %v963, -inf
    %v968 = vmax.f32 %v964, %v965
    %v969 = vmax.f32 %v966, %v967
    %v970 = vmax.f32 %v968, %v969
    %v971 = vrot.slane %v970, 4
    %v972 = vmax.f32 %v970, %v971
    %v973 = vrot.slane %v972, 2
    %v974 = vmax.f32 %v972, %v973
    %v975 = vrot.slane %v974, 1
    %v976 = vmax.f32 %v974, %v975
    %v977 = vlaneseq
    %v978 = vshrl.u32 %v977, 7
    %v979 = vsub.s32 5, %v978
    %v980 = vrot.slane %v735, %v979
    %982 = vbcast.lane.b32.xlu0 %v980, 256
    %v983 = vpop.permute.xlu0 %982
    %s985 = sor.u32 256, 8
    %986 = vbcast.lane.b32.xlu0 %v980, %s985
    %v987 = vpop.permute.xlu0 %986
    %s989 = sor.u32 256, 16
    %990 = vbcast.lane.b32.xlu0 %v980, %s989
    %v991 = vpop.permute.xlu0 %990
    %s993 = sor.u32 256, 24
    %994 = vbcast.lane.b32.xlu0 %v980, %s993
    %v995 = vpop.permute.xlu0 %994
    %vm996 = vcmp.gt.f32.partialorder %v983, 0.0
    %vm997 = vcmp.gt.f32.partialorder %v987, 0.0
    %vm998 = vcmp.gt.f32.partialorder %v991, 0.0
    %vm999 = vcmp.gt.f32.partialorder %v995, 0.0
    %v1000 = vsel %vm996, 1, 0
    %v1001 = vsel %vm997, 1, 0
    %v1002 = vsel %vm998, 1, 0
    %v1003 = vsel %vm999, 1, 0
    %vm1004 = vcmp.eq.s32.totalorder %v1000, 1
    %vm1005 = vcmp.eq.s32.totalorder %v1001, 1
    %vm1006 = vcmp.eq.s32.totalorder %v1002, 1
    %vm1007 = vcmp.eq.s32.totalorder %v1003, 1
    %v1008 = vsel %vm1004, %v731, -1e+30
    %v1009 = vsel %vm1005, %v732, -1e+30
    %v1010 = vsel %vm1006, %v733, -1e+30
    %v1011 = vsel %vm1007, %v734, -1e+30
    %v1012 = vsel %vm771, %v1008, -inf
    %v1013 = vsel %vm771, %v1009, -inf
    %v1014 = vsel %vm771, %v1010, -inf
    %v1015 = vsel %vm771, %v1011, -inf
    %v1016 = vmax.f32 %v1012, %v1013
    %v1017 = vmax.f32 %v1014, %v1015
    %v1018 = vmax.f32 %v1016, %v1017
    %v1019 = vrot.slane %v1018, 4
    %v1020 = vmax.f32 %v1018, %v1019
    %v1021 = vrot.slane %v1020, 2
    %v1022 = vmax.f32 %v1020, %v1021
    %v1023 = vrot.slane %v1022, 1
    %v1024 = vmax.f32 %v1022, %v1023
    %v1025 = vlaneseq
    %v1026 = vshrl.u32 %v1025, 7
    %v1027 = vsub.s32 6, %v1026
    %v1028 = vrot.slane %v735, %v1027
    %1030 = vbcast.lane.b32.xlu0 %v1028, 256
    %v1031 = vpop.permute.xlu0 %1030
    %s1033 = sor.u32 256, 8
    %1034 = vbcast.lane.b32.xlu0 %v1028, %s1033
    %v1035 = vpop.permute.xlu0 %1034
    %s1037 = sor.u32 256, 16
    %1038 = vbcast.lane.b32.xlu0 %v1028, %s1037
    %v1039 = vpop.permute.xlu0 %1038
    %s1041 = sor.u32 256, 24
    %1042 = vbcast.lane.b32.xlu0 %v1028, %s1041
    %v1043 = vpop.permute.xlu0 %1042
    %vm1044 = vcmp.gt.f32.partialorder %v1031, 0.0
    %vm1045 = vcmp.gt.f32.partialorder %v1035, 0.0
    %vm1046 = vcmp.gt.f32.partialorder %v1039, 0.0
    %vm1047 = vcmp.gt.f32.partialorder %v1043, 0.0
    %v1048 = vsel %vm1044, 1, 0
    %v1049 = vsel %vm1045, 1, 0
    %v1050 = vsel %vm1046, 1, 0
    %v1051 = vsel %vm1047, 1, 0
    %vm1052 = vcmp.eq.s32.totalorder %v1048, 1
    %vm1053 = vcmp.eq.s32.totalorder %v1049, 1
    %vm1054 = vcmp.eq.s32.totalorder %v1050, 1
    %vm1055 = vcmp.eq.s32.totalorder %v1051, 1
    %v1056 = vsel %vm1052, %v731, -1e+30
    %v1057 = vsel %vm1053, %v732, -1e+30
    %v1058 = vsel %vm1054, %v733, -1e+30
    %v1059 = vsel %vm1055, %v734, -1e+30
    %v1060 = vsel %vm771, %v1056, -inf
    %v1061 = vsel %vm771, %v1057, -inf
    %v1062 = vsel %vm771, %v1058, -inf
    %v1063 = vsel %vm771, %v1059, -inf
    %v1064 = vmax.f32 %v1060, %v1061
    %v1065 = vmax.f32 %v1062, %v1063
    %v1066 = vmax.f32 %v1064, %v1065
    %v1067 = vrot.slane %v1066, 4
    %v1068 = vmax.f32 %v1066, %v1067
    %v1069 = vrot.slane %v1068, 2
    %v1070 = vmax.f32 %v1068, %v1069
    %v1071 = vrot.slane %v1070, 1
    %v1072 = vmax.f32 %v1070, %v1071
    %v1073 = vlaneseq
    %v1074 = vshrl.u32 %v1073, 7
    %v1075 = vsub.s32 7, %v1074
    %v1076 = vrot.slane %v735, %v1075
    %1078 = vbcast.lane.b32.xlu0 %v1076, 256
    %v1079 = vpop.permute.xlu0 %1078
    %s1081 = sor.u32 256, 8
    %1082 = vbcast.lane.b32.xlu0 %v1076, %s1081
    %v1083 = vpop.permute.xlu0 %1082
    %s1085 = sor.u32 256, 16
    %1086 = vbcast.lane.b32.xlu0 %v1076, %s1085
    %v1087 = vpop.permute.xlu0 %1086
    %s1089 = sor.u32 256, 24
    %1090 = vbcast.lane.b32.xlu0 %v1076, %s1089
    %v1091 = vpop.permute.xlu0 %1090
    %vm1092 = vcmp.gt.f32.partialorder %v1079, 0.0
    %vm1093 = vcmp.gt.f32.partialorder %v1083, 0.0
    %vm1094 = vcmp.gt.f32.partialorder %v1087, 0.0
    %vm1095 = vcmp.gt.f32.partialorder %v1091, 0.0
    %v1096 = vsel %vm1092, 1, 0
    %v1097 = vsel %vm1093, 1, 0
    %v1098 = vsel %vm1094, 1, 0
    %v1099 = vsel %vm1095, 1, 0
    %vm1100 = vcmp.eq.s32.totalorder %v1096, 1
    %vm1101 = vcmp.eq.s32.totalorder %v1097, 1
    %vm1102 = vcmp.eq.s32.totalorder %v1098, 1
    %vm1103 = vcmp.eq.s32.totalorder %v1099, 1
    %v1104 = vsel %vm1100, %v731, -1e+30
    %v1105 = vsel %vm1101, %v732, -1e+30
    %v1106 = vsel %vm1102, %v733, -1e+30
    %v1107 = vsel %vm1103, %v734, -1e+30
    %v1108 = vsel %vm771, %v1104, -inf
    %v1109 = vsel %vm771, %v1105, -inf
    %v1110 = vsel %vm771, %v1106, -inf
    %v1111 = vsel %vm771, %v1107, -inf
    %v1112 = vmax.f32 %v1108, %v1109
    %v1113 = vmax.f32 %v1110, %v1111
    %v1114 = vmax.f32 %v1112, %v1113
    %v1115 = vrot.slane %v1114, 4
    %v1116 = vmax.f32 %v1114, %v1115
    %v1117 = vrot.slane %v1116, 2
    %v1118 = vmax.f32 %v1116, %v1117
    %v1119 = vrot.slane %v1118, 1
    %v1120 = vmax.f32 %v1118, %v1119
    %vm1121 = vcmask 1040384
    %v1122 = vsel %vm1121, %v784, %v832
    %vm1123 = vcmask 1041408
    %v1124 = vsel %vm1123, %v1122, %v880
    %vm1125 = vcmask 1042432
    %v1126 = vsel %vm1125, %v1124, %v928
    %vm1127 = vcmask 1043456
    %v1128 = vsel %vm1127, %v1126, %v976
    %vm1129 = vcmask 1044480
    %v1130 = vsel %vm1129, %v1128, %v1024
    %v1131 = vsel %vm423, %v1130, %v1072
    %vm1132 = vcmask 1046528
    %v1133 = vsel %vm1132, %v1131, %v1120
    %v1134 = vsel %vm162, %v735, 0.0
    %1135 = vadd.xlane.f32.xlu0 %v1134
    %v1136 = vpop.xlane.xlu0 %1135
    %vm1137 = vcmp.gt.f32.partialorder %v1136, 0.0
    %v1138 = vsel %vm1137, 1, 0
    %vm1139 = vcmp.eq.s32.totalorder %v1138, 1
    %v1140 = vsel %vm1139, %v1133, 0.0
    %1141 = vst.msk [vmem:[#allocation2] sm:$0xff] %vm771, %v1140
    // Predicated region
    $region46: #{tpu_custom_call.1} parent=1 // pred_check
      _
    $region47: #{tpu_custom_call.1} parent=1 // pred_check_branch
      %1143 = sbr.rel (0) target = $region49
    $region48: #{tpu_custom_call.1} parent=1 // pred_region
      %s1145 = ssub.s32 128, 128
      %1146 = vsyncadd [#allocation3], %s1145
      %s1148 = sshll.u32 [#allocation2], 4
      %s1149 = int_to_ptr.vmem [resolvable:$true] %s1148
      %1151 = dma.vmem_to_hbm [thread:$0]  %s1149, 128, %s11, [#allocation3]
    $region49: #{tpu_custom_call.1} parent=1 // pred_fallthru
      _
    // Predicated region
    $region50: #{tpu_custom_call.1} parent=1 // pred_check
      _
    $region51: #{tpu_custom_call.1} parent=1 // pred_check_branch
      %1153 = sbr.rel (0) target = $region53
    $region52: #{tpu_custom_call.1} parent=1 // pred_region
      %1154 = dma.done [#allocation3], 128
    $region53: #{tpu_custom_call.1} parent=1 // pred_fallthru
      _
    %1155 = vsyncpa [#allocation3], 1

</llo_original>
